<compile_context>
chip_gen: v5e
topology: v5e:2x2
jax: 0.10.0
libtpu: 0.0.40
codegen_flags: <defaults>
</compile_context>

<pallas_src>
import jax
import jax.numpy as jnp
from jax.experimental import pallas as pl
from jax.experimental.pallas import tpu as pltpu

LANE = 128
MAX_BLOCK_ROWS = 8192        # 4 MiB f32 per operand per pipeline buffer
SINGLE_BLOCK_MAX_ROWS = 256  # below this, a single fused block (no pipelining needed)
NCORES = 2                   # leading "parallel" grid axis; sharded on multi-TC chips


def _round_up(x, k):
    return ((x + k - 1) // k) * k


def _pow_specialized(x, p):
    """x**p using only VPU ops for 'nice' compile-time exponents, else None."""
    if p == 0.0:
        return jnp.ones_like(x)
    if p == 0.5:
        return jnp.sqrt(x)
    if p == float(int(p)) and 0 < int(p) <= 8:
        k = int(p)
        result, base = None, x
        while k:                      # repeated squaring
            if k & 1:
                result = base if result is None else result * base
            k >>= 1
            if k:
                base = base * base
        return result
    return None


def _weight(p, t, epsilon, m, n):
    """|p - t|^m * t^n, gated by (t > epsilon).  Exponents are Python floats."""
    d = jnp.abs(p - t)
    pm = _pow_specialized(d, m)
    pn = _pow_specialized(t, n)
    if pm is not None and pn is not None:
        w = pm * pn                                   # pure VPU
    elif pm is not None:
        w = pm * jnp.exp(n * jnp.log(t))              # 2 EUP ops
    elif pn is not None:
        w = pn * jnp.exp(m * jnp.log(d))              # 2 EUP ops
    else:
        w = jnp.exp(m * jnp.log(d) + n * jnp.log(t))  # 3 EUP ops (fused pows)
    return jnp.where(t > epsilon, w, 0.0)


def _make_single_block_kernel(epsilon, m, n, rows):
    def kernel(p_ref, t_ref, o_ref):
        p = p_ref[...].astype(jnp.float32)
        t = t_ref[...].astype(jnp.float32)
        w = _weight(p, t, epsilon, m, n)
        if rows % 8 == 0 and rows > 8:
            # two-stage reduce: cross-vreg VPU adds first, one XLU reduce last
            w = w.reshape(rows // 8, 8, LANE).sum(axis=0)
        o_ref[0, 0] = jnp.sum(w)

    return kernel


def _make_tiled_kernel(epsilon, m, n, rows, block_rows, total_blocks,
                       steps_per_core):
    sub = block_rows // 8
    partial_last = (rows % block_rows) != 0
    # first (unclamped) global block index that needs any row masking
    first_masked = total_blocks - 1 if partial_last else total_blocks
    needs_mask = partial_last or (NCORES * steps_per_core > total_blocks)

    def kernel(p_ref, t_ref, o_ref, acc_ref):
        i = pl.program_id(0)                 # core (parallel axis)
        j = pl.program_id(1)                 # step within core (reduction axis)
        g = i * steps_per_core + j           # unclamped global block index

        @pl.when(j == 0)
        def _():
            acc_ref[...] = jnp.zeros_like(acc_ref)

        p = p_ref[...].astype(jnp.float32)
        t = t_ref[...].astype(jnp.float32)
        w = _weight(p, t, epsilon, m, n)

        def accumulate(wv):
            # fold into an (8,128) accumulator with pure cross-vreg VPU adds
            acc_ref[...] += wv.reshape(sub, 8, LANE).sum(axis=0)

        if needs_mask:
            @pl.when(g >= first_masked)
            def _():
                row = jax.lax.broadcasted_iota(jnp.int32, w.shape, 0)
                valid = rows - g * block_rows   # <= 0 for duplicated OOB blocks
                accumulate(jnp.where(row < valid, w, 0.0))

            @pl.when(g < first_masked)
            def _():
                accumulate(w)
        else:
            accumulate(w)

        @pl.when(j == steps_per_core - 1)
        def _():
            o_ref[0, 0] = jnp.sum(acc_ref[...])   # single XLU reduce per core

    return kernel


def ktrans_weighted_l1_high_exponential_loss(predictions, target, seg=None, *,
                                             epsilon, m, n):
    """Pallas implementation of Ktrans_weighted_L1_high_exponentialLoss.forward."""
    del seg  # unused, exactly like the PyTorch module
    epsilon = float(epsilon)
    m = float(m)
    n = float(n)

    p_flat = jnp.reshape(predictions, (-1,))
    t_flat = jnp.reshape(target, (-1,))
    total = int(p_flat.shape[0])
    if total == 0:
        return jnp.array(jnp.nan, jnp.float32)   # torch.mean of empty -> nan

    rows = total // LANE
    rem = total - rows * LANE

    tail_sum = jnp.float32(0.0)
    if rem:
        # <128-element remainder folded in with plain JAX (no whole-array pad).
        tail_sum = jnp.sum(_weight(p_flat[rows * LANE:].astype(jnp.float32),
                                   t_flat[rows * LANE:].astype(jnp.float32),
                                   epsilon, m, n))

    if rows == 0:
        return (tail_sum / total).astype(jnp.float32)

    if rem:
        # TODO(synk): this prefix slice copies the arrays once; only hit when
        # total % 128 != 0 (uncommon for NN tensors).
        p_main = p_flat[: rows * LANE]
        t_main = t_flat[: rows * LANE]
    else:
        p_main, t_main = p_flat, t_flat        # bitcast reshapes only

    p2 = p_main.reshape(rows, LANE)
    t2 = t_main.reshape(rows, LANE)

    if rows <= SINGLE_BLOCK_MAX_ROWS:
        out = pl.pallas_call(
            _make_single_block_kernel(epsilon, m, n, rows),
            out_shape=jax.ShapeDtypeStruct((1, 1), jnp.float32),
            grid_spec=pltpu.PrefetchScalarGridSpec(
                num_scalar_prefetch=0,
                grid=(1,),
                in_specs=[
                    pl.BlockSpec((rows, LANE), lambda i: (0, 0)),
                    pl.BlockSpec((rows, LANE), lambda i: (0, 0)),
                ],
                out_specs=pl.BlockSpec((1, 1), lambda i: (0, 0),
                                       memory_space=pltpu.SMEM),
            ),
            compiler_params=pltpu.CompilerParams(
                dimension_semantics=("arbitrary",)),
        )(p2, t2)
        kernel_sum = out[0, 0]
    else:
        # Medium inputs get ~4 blocks (so DMA/compute pipeline); big inputs use
        # 8192-row (4 MiB f32) tiles.  Multiple of 16 rows -> bf16 tiles legal.
        block_rows = min(MAX_BLOCK_ROWS, _round_up(int(pl.cdiv(rows, 4)), 16))
        total_blocks = int(pl.cdiv(rows, block_rows))
        steps_per_core = int(pl.cdiv(total_blocks, NCORES))

        def block_index(i, j):
            # clamp: a core's surplus step re-reads the last block and is masked
            return (jnp.minimum(i * steps_per_core + j, total_blocks - 1), 0)

        out = pl.pallas_call(
            _make_tiled_kernel(epsilon, m, n, rows, block_rows, total_blocks,
                               steps_per_core),
            out_shape=jax.ShapeDtypeStruct((NCORES, 1), jnp.float32),
            grid_spec=pltpu.PrefetchScalarGridSpec(
                num_scalar_prefetch=0,
                grid=(NCORES, steps_per_core),
                in_specs=[
                    pl.BlockSpec((block_rows, LANE), block_index),
                    pl.BlockSpec((block_rows, LANE), block_index),
                ],
                out_specs=pl.BlockSpec((1, 1), lambda i, j: (i, 0),
                                       memory_space=pltpu.SMEM),
                scratch_shapes=[pltpu.VMEM((8, LANE), jnp.float32)],
            ),
            compiler_params=pltpu.CompilerParams(
                dimension_semantics=("parallel", "arbitrary")),
        )(p2, t2)
        kernel_sum = jnp.sum(out)

    return ((kernel_sum + tail_sum) / total).astype(jnp.float32)


def loss_ref(predictions, target, seg, epsilon, m, n):
    """Pure-JAX reference mirroring the PyTorch forward."""
    del seg
    w = (jnp.power(jnp.abs(predictions - target), m)
         * jnp.power(target, n)
         * (target > epsilon))
    return jnp.mean(w)


if __name__ == "__main__":
    key = jax.random.PRNGKey(0)
    epsilon, m, n = 0.3, 1.0, 2.0
    k1, k2, k3, k4, k5, k6, k7 = jax.random.split(key, 7)

    # --- small NCHW case (single-block path, specialized exponents) ---
    pred = jax.random.uniform(k1, (2, 4, 16, 16), dtype=jnp.float32)
    targ = jax.random.uniform(k2, (2, 4, 16, 16), dtype=jnp.float32)
    seg = (jax.random.uniform(k3, (2, 4, 16, 16)) > 0.5).astype(jnp.float32)

    loss = jax.block_until_ready(ktrans_weighted_l1_high_exponential_loss(
        pred, targ, seg, epsilon=epsilon, m=m, n=n))
    ref = loss_ref(pred, targ, seg, epsilon, m, n)
    assert jnp.allclose(loss, ref, rtol=1e-5, atol=1e-6), (loss, ref)

    # --- tiled path: 2-core grid, partial last block, f32 ---
    pred2 = jax.random.uniform(k4, (2, 4, 256, 250), dtype=jnp.float32)
    targ2 = jax.random.uniform(k5, (2, 4, 256, 250), dtype=jnp.float32)
    loss2 = jax.block_until_ready(ktrans_weighted_l1_high_exponential_loss(
        pred2, targ2, None, epsilon=epsilon, m=m, n=n))
    ref2 = loss_ref(pred2, targ2, None, epsilon, m, n)
    assert jnp.allclose(loss2, ref2, rtol=1e-5, atol=1e-6), (loss2, ref2)

    # --- bf16 inputs straight into the kernel (no wrapper upcast copy) ---
    pred3 = pred2.astype(jnp.bfloat16)
    targ3 = targ2.astype(jnp.bfloat16)
    loss3 = jax.block_until_ready(ktrans_weighted_l1_high_exponential_loss(
        pred3, targ3, None, epsilon=epsilon, m=m, n=n))
    ref3 = loss_ref(pred3.astype(jnp.float32), targ3.astype(jnp.float32),
                    None, epsilon, m, n)
    assert jnp.allclose(loss3, ref3, rtol=1e-4, atol=1e-5), (loss3, ref3)

    # --- misaligned total (tiny JAX tail) + general exponents (fused exp/log) ---
    pred4 = jax.random.uniform(k6, (3, 5, 7, 11), dtype=jnp.float32)
    targ4 = jax.random.uniform(k7, (3, 5, 7, 11), dtype=jnp.float32)
    loss4 = jax.block_until_ready(ktrans_weighted_l1_high_exponential_loss(
        pred4, targ4, None, epsilon=0.2, m=1.5, n=0.7))
    ref4 = loss_ref(pred4, targ4, None, 0.2, 1.5, 0.7)
    assert jnp.allclose(loss4, ref4, rtol=1e-5, atol=1e-6), (loss4, ref4)

    print("KERNEL_OK")
</pallas_src>

<mosaic_0001>
module attributes {stable_mosaic.version = 11 : i64} {
  func.func @kernel(%arg0: i32, %arg1: memref<16x128xf32, #tpu.memory_space<vmem>>, %arg2: memref<16x128xf32, #tpu.memory_space<vmem>>, %arg3: memref<1x1xf32, #tpu.memory_space<smem>>) attributes {dimension_semantics = [#tpu.dimension_semantics<arbitrary>], iteration_bounds = array<i64: 1>, scalar_prefetch = 0 : i64, scratch_operands = 0 : i64, tpu.core_type = #tpu.core_type<tc>, window_params = [{pipeline_mode = #tpu.pipeline_mode<synchronous>, transform_indices = @transform_0, window_bounds = array<i64: 16, 128>}, {pipeline_mode = #tpu.pipeline_mode<synchronous>, transform_indices = @transform_1, window_bounds = array<i64: 16, 128>}, {transform_indices = @transform_2, window_bounds = array<i64: 1, 1>}]} {
    %c0 = arith.constant 0 : index
    %c0_0 = arith.constant 0 : index
    %0 = vector.load %arg1[%c0, %c0_0] : memref<16x128xf32, #tpu.memory_space<vmem>>, vector<16x128xf32>
    %c0_1 = arith.constant 0 : index
    %c0_2 = arith.constant 0 : index
    %1 = vector.load %arg2[%c0_1, %c0_2] : memref<16x128xf32, #tpu.memory_space<vmem>>, vector<16x128xf32>
    %2 = arith.subf %0, %1 : vector<16x128xf32>
    %3 = math.absf %2 : vector<16x128xf32>
    %4 = arith.mulf %1, %1 : vector<16x128xf32>
    %5 = arith.mulf %3, %4 : vector<16x128xf32>
    %cst = arith.constant 3.000000e-01 : f32
    %6 = vector.broadcast %cst : f32 to vector<16x128xf32>
    %7 = arith.cmpf ogt, %1, %6 : vector<16x128xf32>
    %cst_3 = arith.constant 0.000000e+00 : f32
    %8 = vector.broadcast %cst_3 : f32 to vector<16x128xf32>
    %9 = arith.select %7, %5, %8 : vector<16x128xi1>, vector<16x128xf32>
    %10 = vector.shape_cast %9 : vector<16x128xf32> to vector<2x8x128xf32>
    %cst_4 = arith.constant dense<0.000000e+00> : vector<8x128xf32>
    %11 = vector.multi_reduction <add>, %10, %cst_4 [0] : vector<2x8x128xf32> to vector<8x128xf32>
    %12 = vector.shape_cast %11 : vector<8x128xf32> to vector<1x8x128xf32>
    %cst_5 = arith.constant dense<0.000000e+00> : vector<1xf32>
    %13 = vector.multi_reduction <add>, %12, %cst_5 [1, 2] : vector<1x8x128xf32> to vector<1xf32>
    %14 = vector.shape_cast %13 : vector<1xf32> to vector<1x1x1xf32>
    %15 = vector.extract %14[0, 0, 0] : f32 from vector<1x1x1xf32>
    %c0_6 = arith.constant 0 : index
    %c0_7 = arith.constant 0 : index
    %16 = memref.load %arg3[%c0_6, %c0_7] : memref<1x1xf32, #tpu.memory_space<smem>>
    memref.store %15, %arg3[%c0_6, %c0_7] : memref<1x1xf32, #tpu.memory_space<smem>>
    return
  }
  func.func @transform_0(%arg0: i32) -> (i32, i32) {
    %c0_i32 = arith.constant 0 : i32
    %c0_i32_0 = arith.constant 0 : i32
    %c0_i32_1 = arith.constant 0 : i32
    return %c0_i32, %c0_i32_0 : i32, i32
  }
  func.func @transform_1(%arg0: i32) -> (i32, i32) {
    %c0_i32 = arith.constant 0 : i32
    %c0_i32_0 = arith.constant 0 : i32
    %c0_i32_1 = arith.constant 0 : i32
    return %c0_i32, %c0_i32_0 : i32, i32
  }
  func.func @transform_2(%arg0: i32) -> (i32, i32) {
    %c0_i32 = arith.constant 0 : i32
    %c0_i32_0 = arith.constant 0 : i32
    %c0_i32_1 = arith.constant 0 : i32
    return %c0_i32, %c0_i32_0 : i32, i32
  }
}

</mosaic_0001>

<llo_original>
// kernel: tpu_custom_call.1
$region0: #{tpu_custom_call.1}
  #allocation0 [shape = 'u32[]', space=smem, size = 0x4, offset = 0x4, fixed_abs, tag = 'smem constant byte address 0x4 - core index']
  #allocation1 [shape = 'u32[72,128]{1,0:T(1,128)}', space=vmem, size = 0x9000, scoped, tag = 'internal scratch']
  %s0 = inlined_call_operand.hbm [shape: f32[16,128], index: 0, kind: input, shape index: {}]
  %s1 = inlined_call_operand.hbm [shape: f32[16,128], index: 1, kind: input, shape index: {}]
  %s2 = inlined_call_operand.hbm [shape: f32[1,1], index: 2, kind: output, shape index: {}]
  %s3 = sld [smem:[#allocation0]]
  $region26: #{tpu_custom_call.1} parent=0
    _
  %s5 = ssub.s32 1, %s3
  %s6 = scalar_select 0, %s5, %s3
  $region1: #{tpu_custom_call.1} parent=0
    #allocation2 [shape = 'u8[8192]{0}', space=vmem, size = 0x2000, scoped, tag = 'input window, operand 0, single buffered']
    #allocation3 [shape = 's32[1]{0}', space=sflag, size = 0x4, scoped, tag = 'scoped memory for tpu_custom_call.1']
    #allocation4 [shape = 's32[1]{0}', space=sflag, size = 0x4, scoped, tag = 'scoped memory for tpu_custom_call.1']
    #allocation5 [shape = 'u8[8192]{0}', space=vmem, size = 0x2000, scoped, tag = 'input window, operand 1, single buffered']
    #allocation6 [shape = 's32[1]{0}', space=sflag, size = 0x4, scoped, tag = 'scoped memory for tpu_custom_call.1']
    #allocation7 [shape = 'u8[512]{0}', space=smem, size = 0x200, scoped, tag = 'output window, operand 0, single buffered']
    %7 = vsyncpa [#allocation3], 0
    %8 = vsyncpa [#allocation6], 0
    %9 = vsyncpa [#allocation4], 0
    // Predicated region
    $region2: #{tpu_custom_call.1} parent=1 // pred_check
      _
    $region3: #{tpu_custom_call.1} parent=1 // pred_check_branch
      %11 = sbr.rel (0) target = $region5
    $region4: #{tpu_custom_call.1} parent=1 // pred_region
      %13 = vsyncadd [#allocation3], 0
      %s14 = sshll.u32 %s0, 4
      %s15 = int_to_ptr.hbm [resolvable:$true] %s14
      %s16 = sshll.u32 [#allocation2], 4
      %s17 = int_to_ptr.vmem [resolvable:$true] %s16
      %22 = dma.hbm_to_vmem [thread:$0]  %s15, 256, %s17, [#allocation3], 128, 128, 8
    $region5: #{tpu_custom_call.1} parent=1 // pred_fallthru
      _
    // Predicated region
    $region6: #{tpu_custom_call.1} parent=1 // pred_check
      _
    $region7: #{tpu_custom_call.1} parent=1 // pred_check_branch
      %24 = sbr.rel (0) target = $region9
    $region8: #{tpu_custom_call.1} parent=1 // pred_region
      %26 = vsyncadd [#allocation6], 0
      %s27 = sshll.u32 %s1, 4
      %s28 = int_to_ptr.hbm [resolvable:$true] %s27
      %s29 = sshll.u32 [#allocation5], 4
      %s30 = int_to_ptr.vmem [resolvable:$true] %s29
      %35 = dma.hbm_to_vmem [thread:$0]  %s28, 256, %s30, [#allocation6], 128, 128, 8
    $region9: #{tpu_custom_call.1} parent=1 // pred_fallthru
      _
    // Predicated region
    $region10: #{tpu_custom_call.1} parent=1 // pred_check
      _
    $region11: #{tpu_custom_call.1} parent=1 // pred_check_branch
      %37 = sbr.rel (0) target = $region13
    $region12: #{tpu_custom_call.1} parent=1 // pred_region
      %39 = dma.done [#allocation3], 256
    $region13: #{tpu_custom_call.1} parent=1 // pred_fallthru
      _
    // Predicated region
    $region14: #{tpu_custom_call.1} parent=1 // pred_check
      _
    $region15: #{tpu_custom_call.1} parent=1 // pred_check_branch
      %41 = sbr.rel (0) target = $region17
    $region16: #{tpu_custom_call.1} parent=1 // pred_region
      %43 = dma.done [#allocation6], 256
    $region17: #{tpu_custom_call.1} parent=1 // pred_fallthru
      _
    %v44 = vld [vmem:[#allocation2] sm:$0xff]
    %v45 = vld [vmem:[#allocation2 + $0x8] sm:$0xff]
    %v46 = vld [vmem:[#allocation5] sm:$0xff]
    %v47 = vld [vmem:[#allocation5 + $0x8] sm:$0xff]
    %v48 = vsub.f32 %v44, %v46
    %v49 = vsub.f32 %v45, %v47
    %v50 = vand.u32 2147483647, %v48
    %v51 = vand.u32 2147483647, %v49
    %v52 = vmul.f32 %v46, %v46
    %v53 = vmul.f32 %v47, %v47
    %v54 = vmul.f32 %v50, %v52
    %v55 = vmul.f32 %v51, %v53
    %vm56 = vcmp.gt.f32.partialorder %v46, 0.3
    %vm57 = vcmp.gt.f32.partialorder %v47, 0.3
    %v58 = vsel %vm56, %v54, 0.0
    %v59 = vsel %vm57, %v55, 0.0
    %v60 = vadd.f32 %v58, %v59
    %61 = vadd.xlane.f32.xlu0 %v60
    %v62 = vpop.xlane.xlu0 %61
    %v63 = vrot.slane %v62, 4
    %v64 = vadd.f32 %v62, %v63
    %v65 = vrot.slane %v64, 2
    %v66 = vadd.f32 %v64, %v65
    %v67 = vrot.slane %v66, 1
    %v68 = vadd.f32 %v66, %v67
    %s69 = vtos %v68
    %s70 = scalar_lea.smem [#allocation7], 0
    %71 = sst [smem:[%s70]] %s69
    // Predicated region
    $region18: #{tpu_custom_call.1} parent=1 // pred_check
      _
    $region19: #{tpu_custom_call.1} parent=1 // pred_check_branch
      %73 = sbr.rel (0) target = $region21
    $region20: #{tpu_custom_call.1} parent=1 // pred_region
      %75 = vsyncadd [#allocation4], 0
      %s77 = sshll.u32 %s2, 4
      %s78 = int_to_ptr.hbm [resolvable:$true] %s77
      %80 = dma.smem_to_hbm [#allocation7], 16, %s78, [#allocation4]
    $region21: #{tpu_custom_call.1} parent=1 // pred_fallthru
      _
    // Predicated region
    $region22: #{tpu_custom_call.1} parent=1 // pred_check
      _
    $region23: #{tpu_custom_call.1} parent=1 // pred_check_branch
      %82 = sbr.rel (0) target = $region25
    $region24: #{tpu_custom_call.1} parent=1 // pred_region
      %84 = dma.done [#allocation4], 16
    $region25: #{tpu_custom_call.1} parent=1 // pred_fallthru
      _
    %85 = sfence
    %86 = vsyncpa [#allocation3], 1
    %87 = vsyncpa [#allocation6], 1
    %88 = vsyncpa [#allocation4], 1

</llo_original>
